<compile_context>
chip_gen: v7x
topology: tpu7x:2x2x1
jax: 0.10.0
libtpu: 0.0.40
codegen_flags: <defaults>
</compile_context>

<pallas_src>
import functools
import math

import jax
import jax.numpy as jnp
from jax import lax
from jax.experimental import pallas as pl
from jax.experimental.pallas import tpu as pltpu

_LN_EPS = 1e-5
_SQRT2 = math.sqrt(2.0)
_GELU_C = math.sqrt(2.0 / math.pi)

# Conservative per-kernel VMEM budget usable on all of v5e/v6e (128 MiB
# physical) and v7x (64 MiB physical).
_VMEM_BUDGET = 40 * 1024 * 1024


def _round_up(n, m):
    return ((n + m - 1) // m) * m


def _make_spec(block_shape, index_map, buffers=None):
    """BlockSpec helper; requests an explicit buffer count when supported."""
    if buffers is None:
        return pl.BlockSpec(block_shape, index_map)
    try:
        return pl.BlockSpec(block_shape, index_map,
                            pipeline_mode=pl.Buffered(buffers))
    except (AttributeError, TypeError):
        # Older jax without pipeline_mode / pl.Buffered: default double-buffer.
        return pl.BlockSpec(block_shape, index_map)


def _mlp_kernel(x_ref, w_ref, bgb_ref, o_ref, h_scr, *, w_resident):
    """One grid step = one layer applied to one batch tile.

    x_ref   : (TILE_B, dim) bf16   padded network input (resident across layers)
    w_ref   : (L, dim, dim) bf16   VMEM-resident weight stack    (w_resident)
              (1, dim, dim) bf16   this layer's streamed weights (otherwise)
    bgb_ref : (L, 8, dim)   f32    packed [bias; gamma; beta; pad], resident
    o_ref   : (TILE_B, dim) f32    padded network output (written on last layer)
    h_scr   : (TILE_B, dim) bf16   activation scratch, persists across layers
    """
    l = pl.program_id(1)
    last = pl.num_programs(1) - 1          # last grid step = output Linear

    # First layer of this batch tile: move the (padded) input into the scratch.
    @pl.when(l == 0)
    def _():
        h_scr[...] = x_ref[...]

    w = w_ref[l] if w_resident else w_ref[0]        # (dim, dim) bf16
    vec = bgb_ref[l]                                # (8, dim)   f32
    bias = vec[0:1, :]
    gamma = vec[1:2, :]
    beta = vec[2:3, :]

    # Linear on the MXU: bf16 inputs, f32 accumulation.
    z = jnp.dot(h_scr[...], w, preferred_element_type=jnp.float32) + bias

    # Hidden layers: LayerNorm (two-pass variance, f32) + tanh-GELU (EUP).
    @pl.when(l < last)
    def _():
        m = jnp.mean(z, axis=-1, keepdims=True)
        d = z - m
        var = jnp.mean(d * d, axis=-1, keepdims=True)
        hn = d * lax.rsqrt(var + _LN_EPS) * gamma + beta
        # tanh-approximate GELU (PyTorch's nn.GELU(approximate='tanh') form);
        # deviates from the exact erf form by <~1e-3, and the tanh goes to the
        # otherwise-idle EUP instead of a long erf polynomial on the VALU.
        g = 0.5 * hn * (1.0 + jnp.tanh(_GELU_C * (hn + 0.044715 * hn * hn * hn)))
        h_scr[...] = g.astype(h_scr.dtype)
        # Dropout: identity in eval mode.
        # TODO(synk): training-mode dropout would need pltpu.prng_seed +
        #             pltpu.stateful_bernoulli; omitted (inference only).

    # Output layer: plain Linear, lane-dense zero-padded f32 store.
    @pl.when(l == last)
    def _():
        o_ref[...] = z.astype(o_ref.dtype)


def _choose_tile_b(batch, dim, vmem_room, w_resident):
    """Bandwidth-aware batch-tile size (rows)."""
    batch_r = _round_up(batch, 8)
    if batch_r <= 128:
        return batch_r
    # Per-row VMEM cost: x bf16 (2 bufs) + out f32 (2 bufs) + bf16 scratch.
    per_row = dim * (2 * 2 + 2 * 4 + 2)
    fit = max(128, (max(vmem_room, 128 * per_row) // per_row) // 128 * 128)
    # Streamed weights need big tiles to amortize the per-layer weight DMA
    # (>= ~650 rows for MXU-bound on v6e); resident weights do not.
    cap = 512 if w_resident else 1024
    # Leave >= 2 batch tiles when the batch allows, so v7x's second TensorCore
    # gets work on the "parallel" batch axis.
    two_tiles = max(128, _round_up((batch_r + 1) // 2, 128))
    tile = min(cap, two_tiles, fit, batch_r)
    return max(128, (tile // 128) * 128)


@functools.partial(jax.jit, static_argnames=("output_dim",))
def net_forward(x, w_stack, bgb_stack, *, output_dim):
    """Fused forward. w_stack: (L, dim, dim) bf16, bgb_stack: (L, 8, dim) f32."""
    batch, din = x.shape
    num_total, dim, dim2 = w_stack.shape
    assert dim == dim2
    if dim % 128 != 0:
        raise ValueError("dim must be a multiple of 128 for this kernel")
    if din > dim or output_dim > dim:
        raise ValueError("input_dim and output_dim must be <= dim in this kernel")

    # --- VMEM budgeting & weight-residency decision --------------------------
    bgb_bytes = num_total * 8 * dim * 4                 # f32, single buffer
    w_res_bytes = num_total * dim * dim * 2             # bf16, single buffer
    w_resident = (w_res_bytes + bgb_bytes) <= _VMEM_BUDGET // 2
    w_bytes = w_res_bytes if w_resident else 2 * dim * dim * 2
    vmem_room = _VMEM_BUDGET - w_bytes - bgb_bytes

    tile_b = _choose_tile_b(batch, dim, vmem_room, w_resident)
    n_bt = pl.cdiv(batch, tile_b)
    b_pad = n_bt * tile_b

    act_bytes = tile_b * dim * (2 * 2 + 2 * 4 + 2)
    vmem_limit = int(min(max((w_bytes + bgb_bytes + act_bytes) * 5 // 4
                             + (2 << 20), 16 << 20), 60 << 20))

    # Zero-pad the input: K padding matches the zero-padded rows of layer 0's
    # weights; padded batch rows are sliced away below.  bf16 halves the DMA
    # (the matmul consumes bf16 anyway).
    x_p = jnp.zeros((b_pad, dim), jnp.bfloat16).at[:batch, :din].set(
        x.astype(jnp.bfloat16))

    if w_resident:
        # Whole weight stack resident in VMEM for the entire kernel.
        w_spec = _make_spec((num_total, dim, dim), lambda b, l: (0, 0, 0),
                            buffers=1)
    else:
        # Stream one layer's weights per grid step (double-buffered).
        w_spec = _make_spec((1, dim, dim), lambda b, l: (l, 0, 0))
    bgb_spec = _make_spec((num_total, 8, dim), lambda b, l: (0, 0, 0), buffers=1)

    out_p = pl.pallas_call(
        functools.partial(_mlp_kernel, w_resident=w_resident),
        out_shape=jax.ShapeDtypeStruct((b_pad, dim), jnp.float32),
        grid_spec=pltpu.PrefetchScalarGridSpec(
            num_scalar_prefetch=0,
            grid=(n_bt, num_total),
            in_specs=[
                # network input: resident across the layer axis
                pl.BlockSpec((tile_b, dim), lambda b, l: (b, 0)),
                w_spec,
                bgb_spec,
            ],
            out_specs=pl.BlockSpec((tile_b, dim), lambda b, l: (b, 0)),
            scratch_shapes=[pltpu.VMEM((tile_b, dim), jnp.bfloat16)],
        ),
        compiler_params=pltpu.CompilerParams(
            dimension_semantics=("parallel", "arbitrary"),
            vmem_limit_bytes=vmem_limit),
    )(x_p, w_stack, bgb_stack)

    return out_p[:batch, :output_dim]


def init_net_params(key, dim, input_dim, output_dim, num_layers):
    """Parameter init mirroring the PyTorch module's shapes/defaults.

    Linear: uniform(-1/sqrt(fan_in), 1/sqrt(fan_in)); LayerNorm: gamma=1, beta=0.
    Weights stored (in_features, out_features) so the kernel does x @ W + b.
    """
    params = []
    dims = [(input_dim, dim)] + [(dim, dim)] * (num_layers - 1)
    for din, dout in dims:
        key, kw, kb = jax.random.split(key, 3)
        bound = 1.0 / math.sqrt(din)
        w = jax.random.uniform(kw, (din, dout), jnp.float32, -bound, bound)
        b = jax.random.uniform(kb, (dout,), jnp.float32, -bound, bound)
        gamma = jnp.ones((dout,), jnp.float32)
        beta = jnp.zeros((dout,), jnp.float32)
        params.append((w, b, gamma, beta))
    key, kw, kb = jax.random.split(key, 3)
    bound = 1.0 / math.sqrt(dim)
    w_out = jax.random.uniform(kw, (dim, output_dim), jnp.float32, -bound, bound)
    b_out = jax.random.uniform(kb, (output_dim,), jnp.float32, -bound, bound)
    return params, (w_out, b_out)


def pack_net_params(hidden_params, out_params, dim, output_dim):
    """Stack + zero-pad all layers into (L, dim, dim) bf16 weights and an
    (8,128)-aligned (L, 8, dim) f32 [bias; gamma; beta; pad] block."""
    num_total = len(hidden_params) + 1
    w_stack = jnp.zeros((num_total, dim, dim), jnp.float32)
    bgb = jnp.zeros((num_total, 8, dim), jnp.float32)
    for i, (w, b, gamma, beta) in enumerate(hidden_params):
        w_stack = w_stack.at[i, : w.shape[0], :].set(w)
        bgb = bgb.at[i, 0, :].set(b)
        bgb = bgb.at[i, 1, :].set(gamma)
        bgb = bgb.at[i, 2, :].set(beta)
    w_out, b_out = out_params
    w_stack = w_stack.at[num_total - 1, :, :output_dim].set(w_out)
    bgb = bgb.at[num_total - 1, 0, :output_dim].set(b_out)
    return w_stack.astype(jnp.bfloat16), bgb


def net_forward_ref(x, hidden_params, out_params):
    """Pure-JAX f32 reference (matches PyTorch semantics, exact erf-GELU)."""
    h = x
    for (w, b, gamma, beta) in hidden_params:
        h = h @ w + b
        mean = jnp.mean(h, axis=-1, keepdims=True)
        var = jnp.mean((h - mean) ** 2, axis=-1, keepdims=True)
        h = (h - mean) / jnp.sqrt(var + _LN_EPS) * gamma + beta
        h = 0.5 * h * (1.0 + lax.erf(h / _SQRT2))
    w_out, b_out = out_params
    return h @ w_out + b_out


if __name__ == "__main__":
    batch = 8
    input_dim = 32
    dim = 128
    output_dim = 16
    num_layers = 3
    dropout = 0.1  # unused at inference

    key = jax.random.PRNGKey(0)
    key, kx, kp = jax.random.split(key, 3)
    x = jax.random.normal(kx, (batch, input_dim), jnp.float32)
    hidden_params, out_params = init_net_params(
        kp, dim, input_dim, output_dim, num_layers)
    w_stack, bgb_stack = pack_net_params(hidden_params, out_params, dim, output_dim)

    out = net_forward(x, w_stack, bgb_stack, output_dim=output_dim)
    out = jax.block_until_ready(out)

    ref = net_forward_ref(x, hidden_params, out_params)
    assert out.shape == (batch, output_dim)
    max_err = float(jnp.max(jnp.abs(out - ref)))
    # bf16 matmul inputs + tanh-approx GELU -> loosened tolerance vs f32 ref.
    assert jnp.allclose(out, ref, atol=5e-2, rtol=5e-2), (
        f"mismatch vs reference (max abs diff = {max_err})")

    print("KERNEL_OK")
</pallas_src>

<mosaic_0001>
module attributes {stable_mosaic.version = 11 : i64} {
  func.func @_mlp_kernel(%arg0: i32, %arg1: i32, %arg2: memref<8x128xbf16, #tpu.memory_space<vmem>>, %arg3: memref<4x128x128xbf16, #tpu.memory_space<vmem>>, %arg4: memref<4x8x128xf32, #tpu.memory_space<vmem>>, %arg5: memref<8x128xf32, #tpu.memory_space<vmem>>, %arg6: memref<8x128xbf16, #tpu.memory_space<vmem>>) attributes {dimension_semantics = [#tpu.dimension_semantics<parallel>, #tpu.dimension_semantics<arbitrary>], iteration_bounds = array<i64: 1, 4>, scalar_prefetch = 0 : i64, scratch_operands = 1 : i64, tpu.core_type = #tpu.core_type<tc>, window_params = [{transform_indices = @transform_0, window_bounds = array<i64: 8, 128>}, {pipeline_mode = #tpu.pipeline_mode<synchronous>, transform_indices = @transform_1, window_bounds = array<i64: 4, 128, 128>}, {pipeline_mode = #tpu.pipeline_mode<synchronous>, transform_indices = @transform_2, window_bounds = array<i64: 4, 8, 128>}, {transform_indices = @transform_3, window_bounds = array<i64: 8, 128>}]} {
    %c0_i32 = arith.constant 0 : i32
    %0 = arith.cmpi eq, %arg1, %c0_i32 : i32
    %1 = arith.extui %0 : i1 to i32
    %c0_i32_0 = arith.constant 0 : i32
    %2 = arith.cmpi ne, %1, %c0_i32_0 : i32
    scf.if %2 {
      %c0_9 = arith.constant 0 : index
      %c0_10 = arith.constant 0 : index
      %22 = vector.load %arg2[%c0_9, %c0_10] : memref<8x128xbf16, #tpu.memory_space<vmem>>, vector<8x128xbf16>
      %c0_11 = arith.constant 0 : index
      %c0_12 = arith.constant 0 : index
      %23 = vector.load %arg6[%c0_11, %c0_12] : memref<8x128xbf16, #tpu.memory_space<vmem>>, vector<8x128xbf16>
      tpu.vector_store %arg6[%c0_11, %c0_12], %22 {strides = array<i32>} : memref<8x128xbf16, #tpu.memory_space<vmem>>, vector<8x128xbf16>,
    } else {
    }
    %3 = arith.index_cast %arg1 : i32 to index
    %c0 = arith.constant 0 : index
    %c0_1 = arith.constant 0 : index
    %4 = vector.load %arg3[%3, %c0, %c0_1] : memref<4x128x128xbf16, #tpu.memory_space<vmem>>, vector<1x128x128xbf16>
    %5 = vector.shape_cast %4 : vector<1x128x128xbf16> to vector<128x128xbf16>
    %6 = arith.index_cast %arg1 : i32 to index
    %c0_2 = arith.constant 0 : index
    %c0_3 = arith.constant 0 : index
    %7 = vector.load %arg4[%6, %c0_2, %c0_3] : memref<4x8x128xf32, #tpu.memory_space<vmem>>, vector<1x8x128xf32>
    %8 = vector.shape_cast %7 : vector<1x8x128xf32> to vector<8x128xf32>
    %9 = vector.extract_strided_slice %8 {offsets = [0, 0], sizes = [1, 128], strides = [1, 1]} : vector<8x128xf32> to vector<1x128xf32>
    %10 = vector.extract_strided_slice %8 {offsets = [1, 0], sizes = [1, 128], strides = [1, 1]} : vector<8x128xf32> to vector<1x128xf32>
    %11 = vector.extract_strided_slice %8 {offsets = [2, 0], sizes = [1, 128], strides = [1, 1]} : vector<8x128xf32> to vector<1x128xf32>
    %c0_4 = arith.constant 0 : index
    %c0_5 = arith.constant 0 : index
    %12 = vector.load %arg6[%c0_4, %c0_5] : memref<8x128xbf16, #tpu.memory_space<vmem>>, vector<8x128xbf16>
    %cst = arith.constant dense<0.000000e+00> : vector<8x128xf32>
    %13 = tpu.matmul %12, %5, %cst {dimension_numbers = #tpu.dot_dimension_numbers<[1], [0], [0], [1], [0, 0, 1, 1], [], []>} : vector<8x128xbf16>, vector<128x128xbf16>, vector<8x128xf32> -> vector<8x128xf32>
    %14 = vector.broadcast %9 : vector<1x128xf32> to vector<8x128xf32>
    %15 = arith.addf %13, %14 : vector<8x128xf32>
    %c3_i32 = arith.constant 3 : i32
    %16 = arith.cmpi slt, %arg1, %c3_i32 : i32
    %17 = arith.extui %16 : i1 to i32
    %c0_i32_6 = arith.constant 0 : i32
    %18 = arith.cmpi ne, %17, %c0_i32_6 : i32
    scf.if %18 {
      %cst_9 = arith.constant dense<0.000000e+00> : vector<8xf32>
      %22 = vector.multi_reduction <add>, %15, %cst_9 [1] : vector<8x128xf32> to vector<8xf32>
      %23 = vector.shape_cast %22 : vector<8xf32> to vector<8x1xf32>
      %cst_10 = arith.constant 1.280000e+02 : f32
      %24 = vector.broadcast %cst_10 : f32 to vector<8x1xf32>
      %25 = arith.divf %23, %24 : vector<8x1xf32>
      %26 = vector.broadcast %25 : vector<8x1xf32> to vector<8x128xf32>
      %27 = arith.subf %15, %26 : vector<8x128xf32>
      %28 = arith.mulf %27, %27 : vector<8x128xf32>
      %cst_11 = arith.constant dense<0.000000e+00> : vector<8xf32>
      %29 = vector.multi_reduction <add>, %28, %cst_11 [1] : vector<8x128xf32> to vector<8xf32>
      %30 = vector.shape_cast %29 : vector<8xf32> to vector<8x1xf32>
      %cst_12 = arith.constant 1.280000e+02 : f32
      %31 = vector.broadcast %cst_12 : f32 to vector<8x1xf32>
      %32 = arith.divf %30, %31 : vector<8x1xf32>
      %cst_13 = arith.constant 9.99999974E-6 : f32
      %33 = vector.broadcast %cst_13 : f32 to vector<8x1xf32>
      %34 = arith.addf %32, %33 : vector<8x1xf32>
      %35 = math.rsqrt %34 : vector<8x1xf32>
      %36 = vector.broadcast %35 : vector<8x1xf32> to vector<8x128xf32>
      %37 = arith.mulf %27, %36 : vector<8x128xf32>
      %38 = vector.broadcast %10 : vector<1x128xf32> to vector<8x128xf32>
      %39 = arith.mulf %37, %38 : vector<8x128xf32>
      %40 = vector.broadcast %11 : vector<1x128xf32> to vector<8x128xf32>
      %41 = arith.addf %39, %40 : vector<8x128xf32>
      %cst_14 = arith.constant 5.000000e-01 : f32
      %42 = vector.broadcast %cst_14 : f32 to vector<8x128xf32>
      %43 = arith.mulf %42, %41 : vector<8x128xf32>
      %cst_15 = arith.constant 4.471500e-02 : f32
      %44 = vector.broadcast %cst_15 : f32 to vector<8x128xf32>
      %45 = arith.mulf %44, %41 : vector<8x128xf32>
      %46 = arith.mulf %45, %41 : vector<8x128xf32>
      %47 = arith.mulf %46, %41 : vector<8x128xf32>
      %48 = arith.addf %41, %47 : vector<8x128xf32>
      %cst_16 = arith.constant 0.797884583 : f32
      %49 = vector.broadcast %cst_16 : f32 to vector<8x128xf32>
      %50 = arith.mulf %49, %48 : vector<8x128xf32>
      %51 = math.tanh %50 : vector<8x128xf32>
      %cst_17 = arith.constant 1.000000e+00 : f32
      %52 = vector.broadcast %cst_17 : f32 to vector<8x128xf32>
      %53 = arith.addf %52, %51 : vector<8x128xf32>
      %54 = arith.mulf %43, %53 : vector<8x128xf32>
      %55 = arith.truncf %54 : vector<8x128xf32> to vector<8x128xbf16>
      %c0_18 = arith.constant 0 : index
      %c0_19 = arith.constant 0 : index
      %56 = vector.load %arg6[%c0_18, %c0_19] : memref<8x128xbf16, #tpu.memory_space<vmem>>, vector<8x128xbf16>
      tpu.vector_store %arg6[%c0_18, %c0_19], %55 {strides = array<i32>} : memref<8x128xbf16, #tpu.memory_space<vmem>>, vector<8x128xbf16>,
    } else {
    }
    %c3_i32_7 = arith.constant 3 : i32
    %19 = arith.cmpi eq, %arg1, %c3_i32_7 : i32
    %20 = arith.extui %19 : i1 to i32
    %c0_i32_8 = arith.constant 0 : i32
    %21 = arith.cmpi ne, %20, %c0_i32_8 : i32
    scf.if %21 {
      %c0_9 = arith.constant 0 : index
      %c0_10 = arith.constant 0 : index
      %22 = vector.load %arg5[%c0_9, %c0_10] : memref<8x128xf32, #tpu.memory_space<vmem>>, vector<8x128xf32>
      tpu.vector_store %arg5[%c0_9, %c0_10], %15 {strides = array<i32>} : memref<8x128xf32, #tpu.memory_space<vmem>>, vector<8x128xf32>,
    } else {
    }
    return
  }
  func.func @transform_0(%arg0: i32, %arg1: i32) -> (i32, i32) {
    %c0_i32 = arith.constant 0 : i32
    %c0_i32_0 = arith.constant 0 : i32
    return %arg0, %c0_i32 : i32, i32
  }
  func.func @transform_1(%arg0: i32, %arg1: i32) -> (i32, i32, i32) {
    %c0_i32 = arith.constant 0 : i32
    %c0_i32_0 = arith.constant 0 : i32
    %c0_i32_1 = arith.constant 0 : i32
    %c0_i32_2 = arith.constant 0 : i32
    return %c0_i32, %c0_i32_0, %c0_i32_1 : i32, i32, i32
  }
  func.func @transform_2(%arg0: i32, %arg1: i32) -> (i32, i32, i32) {
    %c0_i32 = arith.constant 0 : i32
    %c0_i32_0 = arith.constant 0 : i32
    %c0_i32_1 = arith.constant 0 : i32
    %c0_i32_2 = arith.constant 0 : i32
    return %c0_i32, %c0_i32_0, %c0_i32_1 : i32, i32, i32
  }
  func.func @transform_3(%arg0: i32, %arg1: i32) -> (i32, i32) {
    %c0_i32 = arith.constant 0 : i32
    %c0_i32_0 = arith.constant 0 : i32
    return %arg0, %c0_i32 : i32, i32
  }
}

</mosaic_0001>

<llo_original>
// kernel: net_forward.1
$region0: #{net_forward.1}
  #allocation0 [shape = 'u32[]', space=smem, size = 0x4, offset = 0x4, fixed_abs, tag = 'smem constant byte address 0x4 - core index']
  #allocation1 [shape = 'u32[144,128]{1,0:T(1,128)}', space=vmem, size = 0x12000, scoped, tag = 'internal scratch']
  #allocation2 [shape = 'bf16[8,128]{1,0:T(8,128)(2,1)}', space=vmem, size = 0x800, scoped, tag = 'scratch operand']
  %s0 = inlined_call_operand.vmem [shape: bf16[8,128], index: 0, kind: input, shape index: {}]
  %s1 = inlined_call_operand.hbm [shape: bf16[4,128,128], index: 1, kind: input, shape index: {}]
  %s2 = inlined_call_operand.vmem [shape: f32[4,8,128], index: 2, kind: input, shape index: {}]
  %s3 = inlined_call_operand.hbm [shape: f32[8,128], index: 3, kind: output, shape index: {}]
  %s4 = sld [smem:[#allocation0]]
  $region61: #{net_forward.1} parent=0
    _
  %s6 = ssub.s32 1, %s4
  %s7 = scalar_select 0, %s6, %s4
  $region1: #{net_forward.1} parent=0
    #allocation3 [shape = 'u8[131072]{0}', space=vmem, size = 0x20000, scoped, tag = 'input window, operand 1, single buffered']
    #allocation4 [shape = 's32[2]{0}', space=sflag, size = 0x8, scoped, tag = 'scoped memory for net_forward.1']
    #allocation5 [shape = 's32[2]{0}', space=sflag, size = 0x8, scoped, tag = 'scoped memory for net_forward.1']
    #allocation6 [shape = 'u8[4096]{0}', space=vmem, size = 0x1000, scoped, tag = 'output window, operand 0, single buffered']
    %8 = vsyncpa [#allocation4], 0
    %9 = vsyncpa [#allocation5], 0
    loop: start=0, step=1, limit=6
    $region2: #{net_forward.1} parent=1 // loop_pre_header
      _
    $region3: #{net_forward.1} parent=1 // loop_header
      %s11 = sphi 0, %s15
      %p12 = scmp.ge.s32.totalorder %s11, 6
      %s18 = sphi 0, %s30
      %s19 = sphi 0, %s26
      %s20 = sphi 0, %s18
      %s21 = sphi 0, %s19
      %s22 = sphi 0, %s20
      %s23 = sphi 0, %s21
      %s33 = sphi 0, %s35
      %s36 = sphi 0, %s33
      %s37 = sphi 0, %s36
      %s53 = sphi 0, %s37
      %s57 = sphi 0, %s57
      %s59 = sphi 0, %s57
      %s60 = sphi 0, %s59
      %s74 = sphi 0, %s60
      %s78 = sphi 0, %s78
      %s80 = sphi 0, %s78
      %s81 = sphi 0, %s80
      %s95 = sphi 0, %s81
      %s101 = sphi 0, %s103
      %s104 = sphi 0, %s101
      %s105 = sphi 0, %s104
      %s121 = sphi 0, %s105
    $region4: #{net_forward.1} parent=1 // loop_header_branch
      %14 = sbr.rel (%p12) target = $region8
    $region5: #{net_forward.1} parent=1 // loop_body
      %s16 = ssub.s32 %s11, 1
      %s17 = ssub.s32 %s11, 2
      %s24 = sadd.s32 1, %s19
      %p25 = scmp.ge.s32.totalorder %s24, 4
      %s26 = scalar_select %p25, 0, %s24
      %s27 = sadd.s32 1, %s18
      %s28 = scalar_select %p25, %s27, %s18
      %p29 = scmp.ge.s32.totalorder %s28, 1
      %s30 = scalar_select %p29, 0, %s28
      %s31 = ssub.s32 %s18, %s30
      %p32 = scmp.eq.s32.totalorder %s31, 0
      %s34 = sadd.s32 %s33, 1
      %s35 = scalar_select %p32, %s33, %s34
      %p38 = pneg %p32
      %p39 = scmp.eq.s32.totalorder %s11, 3
      %p40 = por %p38, %p39
      %p41 = scmp.ne.s32.totalorder %s33, %s36
      %p42 = scmp.eq.s32.totalorder %s11, 0
      %p43 = por %p41, %p42
      %p44 = scmp.ne.s32.totalorder %s33, %s36
      %p45 = scmp.eq.s32.totalorder %s16, 3
      %p46 = por %p44, %p45
      %p47 = scmp.ne.s32.totalorder %s36, %s37
      %p48 = scmp.eq.s32.totalorder %s16, 0
      %p49 = por %p47, %p48
      %p50 = scmp.ne.s32.totalorder %s36, %s37
      %p51 = scmp.eq.s32.totalorder %s17, 3
      %p52 = por %p50, %p51
      %p54 = scmp.ne.s32.totalorder %s37, %s53
      %p55 = scmp.eq.s32.totalorder %s17, 0
      %p56 = por %p54, %p55
      %s58 = sadd.s32 %s57, 1
      %p61 = scmp.eq.s32.totalorder %s11, 3
      %p62 = scmp.ne.s32.totalorder %s57, %s59
      %p63 = scmp.eq.s32.totalorder %s11, 0
      %p64 = por %p62, %p63
      %p65 = scmp.ne.s32.totalorder %s57, %s59
      %p66 = scmp.eq.s32.totalorder %s16, 3
      %p67 = por %p65, %p66
      %p68 = scmp.ne.s32.totalorder %s59, %s60
      %p69 = scmp.eq.s32.totalorder %s16, 0
      %p70 = por %p68, %p69
      %p71 = scmp.ne.s32.totalorder %s59, %s60
      %p72 = scmp.eq.s32.totalorder %s17, 3
      %p73 = por %p71, %p72
      %p75 = scmp.ne.s32.totalorder %s60, %s74
      %p76 = scmp.eq.s32.totalorder %s17, 0
      %p77 = por %p75, %p76
      %s79 = sadd.s32 %s78, 1
      %p82 = scmp.eq.s32.totalorder %s11, 3
      %p83 = scmp.ne.s32.totalorder %s78, %s80
      %p84 = scmp.eq.s32.totalorder %s11, 0
      %p85 = por %p83, %p84
      %p86 = scmp.ne.s32.totalorder %s78, %s80
      %p87 = scmp.eq.s32.totalorder %s16, 3
      %p88 = por %p86, %p87
      %p89 = scmp.ne.s32.totalorder %s80, %s81
      %p90 = scmp.eq.s32.totalorder %s16, 0
      %p91 = por %p89, %p90
      %p92 = scmp.ne.s32.totalorder %s80, %s81
      %p93 = scmp.eq.s32.totalorder %s17, 3
      %p94 = por %p92, %p93
      %p96 = scmp.ne.s32.totalorder %s81, %s95
      %p97 = scmp.eq.s32.totalorder %s17, 0
      %p98 = por %p96, %p97
      %s99 = ssub.s32 %s18, %s30
      %p100 = scmp.eq.s32.totalorder %s99, 0
      %s102 = sadd.s32 %s101, 1
      %s103 = scalar_select %p100, %s101, %s102
      %p106 = pneg %p100
      %p107 = scmp.eq.s32.totalorder %s11, 3
      %p108 = por %p106, %p107
      %p109 = scmp.ne.s32.totalorder %s101, %s104
      %p110 = scmp.eq.s32.totalorder %s11, 0
      %p111 = por %p109, %p110
      %p112 = scmp.ne.s32.totalorder %s101, %s104
      %p113 = scmp.eq.s32.totalorder %s16, 3
      %p114 = por %p112, %p113
      %p115 = scmp.ne.s32.totalorder %s104, %s105
      %p116 = scmp.eq.s32.totalorder %s16, 0
      %p117 = por %p115, %p116
      %p118 = scmp.ne.s32.totalorder %s104, %s105
      %p119 = scmp.eq.s32.totalorder %s17, 3
      %p120 = por %p118, %p119
      %p122 = scmp.ne.s32.totalorder %s105, %s121
      %p123 = scmp.eq.s32.totalorder %s17, 0
      %p124 = por %p122, %p123
      %p125 = scmp.le.s32.totalorder 1, %s11
      %p126 = scmp.lt.s32.totalorder %s11, 5
      %p127 = pnand %p125, %p126
      %p128 = pneg %p127
      // Predicated region
      $region9: #{net_forward.1} parent=5 // pred_check
        _
      $region10: #{net_forward.1} parent=5 // pred_check_branch
        %130 = sbr.rel (%p127) target = $region12
      $region11: #{net_forward.1} parent=5 // pred_region
        %s131 = ssub.s32 %s11, 1
        // Predicated region
        $region13: #{net_forward.1} parent=11 // pred_check
          %p132 = pneg %p49
        $region14: #{net_forward.1} parent=11 // pred_check_branch
          %134 = sbr.rel (%p132) target = $region16
        $region15: #{net_forward.1} parent=11 // pred_region
          %p135 = scmp.lt.s32.totalorder %s20, 0
          %s136 = scalar_select %p135, %s20, 0
          %s137 = smul.addr %s136, 4
          %s138 = scalar_lea.vmem %s0, %s137
        $region16: #{net_forward.1} parent=11 // pred_fallthru
          _
        // Predicated region
        $region17: #{net_forward.1} parent=11 // pred_check
          %p139 = pneg %p70
        $region18: #{net_forward.1} parent=11 // pred_check_branch
          %141 = sbr.rel (%p139) target = $region20
        $region19: #{net_forward.1} parent=11 // pred_region
          %s143 = ssub.s32 4096, 4096
          %144 = vsyncadd [#allocation4], %s143
          %s145 = sshll.u32 [#allocation3], 4
          %s146 = int_to_ptr.vmem [resolvable:$true] %s145
          %151 = dma.hbm_to_vmem [thread:$0]  %s1, 4096, %s146, [#allocation4], 64, 64, 4
        $region20: #{net_forward.1} parent=11 // pred_fallthru
          _
        // Predicated region
        $region21: #{net_forward.1} parent=11 // pred_check
          %p152 = pneg %p91
        $region22: #{net_forward.1} parent=11 // pred_check_branch
          %154 = sbr.rel (%p152) target = $region24
        $region23: #{net_forward.1} parent=11 // pred_region
          _
        $region24: #{net_forward.1} parent=11 // pred_fallthru
          _
      $region12: #{net_forward.1} parent=5 // pred_fallthru
        _
      %p155 = scmp.lt.s32.totalorder %s11, 4
      // Predicated region
      $region25: #{net_forward.1} parent=5 // pred_check
        %p156 = pneg %p155
      $region26: #{net_forward.1} parent=5 // pred_check_branch
        %158 = sbr.rel (%p156) target = $region28
      $region27: #{net_forward.1} parent=5 // pred_region
        _
      $region28: #{net_forward.1} parent=5 // pred_fallthru
        _
      %p159 = scmp.le.s32.totalorder 1, %s11
      %p160 = scmp.lt.s32.totalorder %s11, 5
      %p161 = pnand %p159, %p160
      %p162 = pneg %p161
      // Predicated region
      $region29: #{net_forward.1} parent=5 // pred_check
        _
      $region30: #{net_forward.1} parent=5 // pred_check_branch
        %164 = sbr.rel (%p161) target = $region32
      $region31: #{net_forward.1} parent=5 // pred_region
        %s165 = ssub.s32 %s11, 1
        // Predicated region
        $region33: #{net_forward.1} parent=31 // pred_check
          %p166 = pneg %p70
        $region34: #{net_forward.1} parent=31 // pred_check_branch
          %168 = sbr.rel (%p166) target = $region36
        $region35: #{net_forward.1} parent=31 // pred_region
          %169 = dma.done [#allocation4], 4096
        $region36: #{net_forward.1} parent=31 // pred_fallthru
          _
        %p170 = scmp.lt.s32.totalorder %s20, 0
        %s171 = scalar_select %p170, %s20, 0
        %s172 = smul.addr %s171, 4
        %s173 = scalar_lea.vmem %s0, %s172
        %p174 = pneg %p49
        %p175 = pneg %p46
        %p176 = pneg %p70
        %p177 = pneg %p67
        %p178 = pneg %p91
        %p179 = pneg %p88
        %p180 = pneg %p117
        %p181 = pneg %p114
        %p182 = scmp.lt.s32.totalorder %s20, 0
        %s183 = scalar_select %p182, %s20, 0
        %s184 = smul.addr %s183, 4
        %s185 = scalar_lea.vmem %s0, %s184
        %p187 = scmp.eq.s32.totalorder %s21, 0
        // Predicated region
        $region37: #{net_forward.1} parent=31 // pred_check
          %p188 = pneg %p187
        $region38: #{net_forward.1} parent=31 // pred_check_branch
          %190 = sbr.rel (%p188) target = $region40
        $region39: #{net_forward.1} parent=31 // pred_region
          %v191 = vld [vmem:[%s185] sm:$0xf]
          %192 = vst [vmem:[#allocation2] sm:$0xf] %v191
        $region40: #{net_forward.1} parent=31 // pred_fallthru
          _
        %s193 = smul.u32 %s21, 16
        %s194 = smul.addr %s193, 4
        %s195 = scalar_lea.vmem [#allocation3], %s194
        %v196 = vld [vmem:[%s195] sm:$0xf]
        %v197 = vld [vmem:[%s195 + $0x4] sm:$0xf]
        %v198 = vld [vmem:[%s195 + $0x8] sm:$0xf]
        %v199 = vld [vmem:[%s195 + $0xc] sm:$0xf]
        %v200 = vld [vmem:[%s195 + $0x10] sm:$0xf]
        %v201 = vld [vmem:[%s195 + $0x14] sm:$0xf]
        %v202 = vld [vmem:[%s195 + $0x18] sm:$0xf]
        %v203 = vld [vmem:[%s195 + $0x1c] sm:$0xf]
        %v204 = vld [vmem:[%s195 + $0x20] sm:$0xf]
        %v205 = vld [vmem:[%s195 + $0x24] sm:$0xf]
        %v206 = vld [vmem:[%s195 + $0x28] sm:$0xf]
        %v207 = vld [vmem:[%s195 + $0x2c] sm:$0xf]
        %v208 = vld [vmem:[%s195 + $0x30] sm:$0xf]
        %v209 = vld [vmem:[%s195 + $0x34] sm:$0xf]
        %v210 = vld [vmem:[%s195 + $0x38] sm:$0xf]
        %v211 = vld [vmem:[%s195 + $0x3c] sm:$0xf]
        %s212 = smul.u32 %s21, 8
        %s213 = scalar_lea.vmem %s2, %s212
        %v214 = vld [vmem:[%s213] sm:$0xff]
        %v215 = vld [vmem:[#allocation2] sm:$0xf]
        %v216 = vlaneseq
        %v217 = vshrl.u32 %v216, 7
        %v218 = vsub.s32 0, %v217
        %v219 = vrot.slane %v214, %v218
        %v236 = vunpack.c.l.b16 %v196
        %v237 = vunpack.c.l.b16 %v197
        %v238 = vunpack.c.l.b16 %v198
        %v239 = vunpack.c.l.b16 %v199
        %v240 = vunpack.c.l.b16 %v200
        %v241 = vunpack.c.l.b16 %v201
        %v242 = vunpack.c.l.b16 %v202
        %v243 = vunpack.c.l.b16 %v203
        %v244 = vunpack.c.l.b16 %v204
        %v245 = vunpack.c.l.b16 %v205
        %v246 = vunpack.c.l.b16 %v206
        %v247 = vunpack.c.l.b16 %v207
        %v248 = vunpack.c.l.b16 %v208
        %v249 = vunpack.c.l.b16 %v209
        %v250 = vunpack.c.l.b16 %v210
        %v251 = vunpack.c.l.b16 %v211
        %v252 = vpack.c.b16 %v237, %v236
        %v253 = vpack.c.b16 %v239, %v238
        %v254 = vpack.c.b16 %v241, %v240
        %v255 = vpack.c.b16 %v243, %v242
        %v256 = vpack.c.b16 %v245, %v244
        %v257 = vpack.c.b16 %v247, %v246
        %v258 = vpack.c.b16 %v249, %v248
        %v259 = vpack.c.b16 %v251, %v250
        %268 = vmatprep.subr.bf16.mxu0 0
        %269 = vmatpush1.bf16.msra.mxu0 %v252
        %270 = vmatprep.subr.bf16.mxu0 0
        %271 = vmatpush1.bf16.msra.mxu0 %v253
        %272 = vmatprep.subr.bf16.mxu0 0
        %273 = vmatpush1.bf16.msra.mxu0 %v254
        %274 = vmatprep.subr.bf16.mxu0 0
        %275 = vmatpush1.bf16.msra.mxu0 %v255
        %276 = vmatprep.subr.bf16.mxu0 0
        %277 = vmatpush1.bf16.msra.mxu0 %v256
        %278 = vmatprep.subr.bf16.mxu0 0
        %279 = vmatpush1.bf16.msra.mxu0 %v257
        %280 = vmatprep.subr.bf16.mxu0 0
        %281 = vmatpush1.bf16.msra.mxu0 %v258
        %282 = vmatprep.subr.bf16.mxu0 0
        %283 = vmatpush1.bf16.msra.mxu0 %v259
        %284 = vmatprep.subr.bf16.mxu0 0
        %285 = vmatpush1.bf16.msra.mxu0 0
        %286 = vmatprep.subr.bf16.mxu0 0
        %287 = vmatpush1.bf16.msra.mxu0 0
        %288 = vmatprep.subr.bf16.mxu0 0
        %289 = vmatpush1.bf16.msra.mxu0 0
        %290 = vmatprep.subr.bf16.mxu0 0
        %291 = vmatpush1.bf16.msra.mxu0 0
        %292 = vmatprep.subr.bf16.mxu0 0
        %293 = vmatpush1.bf16.msra.mxu0 0
        %294 = vmatprep.subr.bf16.mxu0 0
        %295 = vmatpush1.bf16.msra.mxu0 0
        %296 = vmatprep.subr.bf16.mxu0 0
        %297 = vmatpush1.bf16.msra.mxu0 0
        %298 = vmatprep.subr.bf16.mxu0 0
        %299 = vmatpush1.bf16.msra.mxu0 0
        %300 = vmatprep.mubr.bf16.mxu0 0
        %301 = vmatmul.mubr.bf16.gmra.mrb[0].mxu0 %v215
        %v302 = vpop.f32.mrb[0].mxu0
        %v303 = vadd.f32 %v219, %v302
        %v304 = vpop.f32.mrb[0].mxu0
        %v305 = vpop.f32.mrb[0].mxu0
        %v306 = vpop.f32.mrb[0].mxu0
        %307 = vdwg.mxu0
        %p308 = scmp.lt.s32.totalorder %s21, 3
        // Predicated region
        $region41: #{net_forward.1} parent=31 // pred_check
          %p309 = pneg %p308
        $region42: #{net_forward.1} parent=31 // pred_check_branch
          %311 = sbr.rel (%p309) target = $region44
        $region43: #{net_forward.1} parent=31 // pred_region
          %312 = vadd.xlane.f32.xlu0 %v303
          %v313 = vpop.xlane.xlu0 %312
          %v314 = vrcp.pop 128.0
          %v315 = vmul.f32 %v313, %v314
          %v316 = vsub.f32 %v303, %v315
          %v317 = vmul.f32 %v316, %v316
          %318 = vadd.xlane.f32.xlu0 %v317
          %v319 = vpop.xlane.xlu0 %318
          %v320 = vmul.f32 %v319, %v314
          %v321 = vadd.f32 %v320, 1e-05
          %v322 = vrsqrt.pop %v321
          %v323 = vmul.f32 %v316, %v322
          %v324 = vlaneseq
          %v325 = vshrl.u32 %v324, 7
          %v326 = vsub.s32 1, %v325
          %v327 = vrot.slane %v214, %v326
          %v328 = vmul.f32 %v323, %v327
          %v329 = vlaneseq
          %v330 = vshrl.u32 %v329, 7
          %v331 = vsub.s32 2, %v330
          %v332 = vrot.slane %v214, %v331
          %v333 = vadd.f32 %v328, %v332
          %v334 = vmul.f32 %v333, 0.5
          %v335 = vmul.f32 %v333, 0.044715
          %v336 = vmul.f32 %v335, %v333
          %v337 = vmul.f32 %v336, %v333
          %v338 = vadd.f32 %v333, %v337
          %v339 = vmul.f32 %v338, 0.7978846
          %v340 = vtanh.pop %v339
          %v341 = vadd.f32 %v340, 1.0
          %v342 = vmul.f32 %v334, %v341
          %v343 = vpack.c.bf16 %v342, %v342
          %344 = vst [vmem:[#allocation2] sm:$0xf] %v343
        $region44: #{net_forward.1} parent=31 // pred_fallthru
          _
        %p345 = scmp.eq.s32.totalorder %s21, 3
        // Predicated region
        $region45: #{net_forward.1} parent=31 // pred_check
          %p346 = pneg %p345
        $region46: #{net_forward.1} parent=31 // pred_check_branch
          %348 = sbr.rel (%p346) target = $region48
        $region47: #{net_forward.1} parent=31 // pred_region
          %349 = vst [vmem:[#allocation6] sm:$0xff] %v303
        $region48: #{net_forward.1} parent=31 // pred_fallthru
          _
        // Predicated region
        $region49: #{net_forward.1} parent=31 // pred_check
          %p350 = pneg %p114
        $region50: #{net_forward.1} parent=31 // pred_check_branch
          %352 = sbr.rel (%p350) target = $region52
        $region51: #{net_forward.1} parent=31 // pred_region
          %s354 = ssub.s32 128, 128
          %355 = vsyncadd [#allocation5], %s354
          %s356 = smul.addr %s20, 128
          %s357 = scalar_lea.hbm %s3, %s356
          %s359 = sshll.u32 [#allocation6], 4
          %s360 = int_to_ptr.vmem [resolvable:$true] %s359
          %362 = dma.vmem_to_hbm [thread:$0]  %s360, 128, %s357, [#allocation5]
        $region52: #{net_forward.1} parent=31 // pred_fallthru
          _
        // Predicated region
        $region53: #{net_forward.1} parent=31 // pred_check
          %p363 = pneg %p114
        $region54: #{net_forward.1} parent=31 // pred_check_branch
          %365 = sbr.rel (%p363) target = $region56
        $region55: #{net_forward.1} parent=31 // pred_region
          %366 = dma.done [#allocation5], 128
        $region56: #{net_forward.1} parent=31 // pred_fallthru
          _
      $region32: #{net_forward.1} parent=5 // pred_fallthru
        _
      %p367 = scmp.le.s32.totalorder 2, %s11
      // Predicated region
      $region57: #{net_forward.1} parent=5 // pred_check
        %p368 = pneg %p367
      $region58: #{net_forward.1} parent=5 // pred_check_branch
        %370 = sbr.rel (%p368) target = $region60
      $region59: #{net_forward.1} parent=5 // pred_region
        %s371 = ssub.s32 %s11, 2
      $region60: #{net_forward.1} parent=5 // pred_fallthru
        _
    $region6: #{net_forward.1} parent=1 // loop_footer
      %s15 = sadd.s32 1, %s11
    $region7: #{net_forward.1} parent=1 // loop_footer_branch
      %10 = sbr.rel target = $region3
    $region8: #{net_forward.1} parent=1 // loop_exit
      _
    %372 = vsyncpa [#allocation4], 1
    %s373 = scalar_lea.sflag [#allocation4], 1
    %374 = vsyncpa %s373, 1
    %375 = vsyncpa [#allocation5], 1
    %s376 = scalar_lea.sflag [#allocation5], 1
    %377 = vsyncpa %s376, 1

</llo_original>
